<compile_context>
chip_gen: v5e
topology: v5e:2x2
jax: 0.10.0
libtpu: 0.0.40
codegen_flags: <defaults>
</compile_context>

<pallas_src>
import functools

import jax
import jax.numpy as jnp
from jax import lax
from jax.experimental import pallas as pl
from jax.experimental.pallas import tpu as pltpu


def _round_up(x, m):
    return ((x + m - 1) // m) * m


def _patch_proj_kernel(x_ref, w_ref, b_ref, o_ref):
    # x_ref: (TM, K) bf16 patches, w_ref: (K, Npad) bf16, b_ref: (1, Npad) f32
    acc = jnp.dot(x_ref[...], w_ref[...], preferred_element_type=jnp.float32)
    o_ref[...] = (acc + b_ref[...]).astype(o_ref.dtype)


def patch_embed_2d(x, weight, bias, patch_size, *, tm=2048,
                   compute_dtype=jnp.bfloat16):
    """Forward of PatchEmbed2D (norm_layer=None).

    x:      (B, C, H, W)          NCHW, like the PyTorch module
    weight: (embed_dim, C, p, p)  conv weight (PyTorch OIHW)
    bias:   (embed_dim,)
    returns (B, embed_dim, H//p, W//p)
    """
    B, C, H, W = x.shape
    p = patch_size
    assert H % p == 0 and W % p == 0
    Hp, Wp = H // p, W // p
    embed_dim = weight.shape[0]
    K = C * p * p
    M = B * Hp * Wp

    LANE = 128
    N_pad = _round_up(embed_dim, LANE)

    # ---- glue: patch extraction + bf16 cast (one fused HBM pass) ----
    xp = (x.reshape(B, C, Hp, p, Wp, p)
           .transpose(0, 2, 4, 1, 3, 5)
           .reshape(M, K)
           .astype(compute_dtype))

    # Tile over M; pad M up to a multiple of the tile (zero rows -> bias only,
    # sliced off below).  TM is a multiple of 256 (>= 8/16 sublane packing).
    TM = min(tm, _round_up(M, 256))
    M_pad = _round_up(M, TM)
    if M_pad != M:
        xp = jnp.pad(xp, ((0, M_pad - M), (0, 0)))

    # (embed_dim, C, p, p) -> (K, embed_dim), pad feature dim to lane width.
    wm = weight.reshape(embed_dim, K).T.astype(compute_dtype)
    b2 = bias.astype(jnp.float32).reshape(1, embed_dim)
    if N_pad != embed_dim:
        wm = jnp.pad(wm, ((0, 0), (0, N_pad - embed_dim)))
        b2 = jnp.pad(b2, ((0, 0), (0, N_pad - embed_dim)))

    grid = (pl.cdiv(M_pad, TM),)

    out = pl.pallas_call(
        _patch_proj_kernel,
        out_shape=jax.ShapeDtypeStruct((M_pad, N_pad), x.dtype),
        grid=grid,
        in_specs=[
            pl.BlockSpec((TM, K), lambda i: (i, 0)),       # patch tiles, pipelined
            pl.BlockSpec((K, N_pad), lambda i: (0, 0)),    # weight, VMEM-resident
            pl.BlockSpec((1, N_pad), lambda i: (0, 0)),    # bias,   VMEM-resident
        ],
        out_specs=pl.BlockSpec((TM, N_pad), lambda i: (i, 0)),
        compiler_params=pltpu.CompilerParams(
            dimension_semantics=("parallel",)),
    )(xp, wm, b2)

    # TODO(synk): norm_layer is None in the default config; a supplied
    # norm_layer would be applied here (on the NCHW output, as in PyTorch).

    # ---- glue: slice off padding and go back to NCHW (one fused pass) ----
    out = out[:M, :embed_dim]
    return out.reshape(B, Hp, Wp, embed_dim).transpose(0, 3, 1, 2)


if __name__ == "__main__":
    # Module defaults: patch_size=4, in_chans=6, embed_dim=96, norm_layer=None
    patch_size = 4
    in_chans = 6
    embed_dim = 96
    B, H, W = 2, 16, 16

    key = jax.random.PRNGKey(0)
    kx, kw, kb = jax.random.split(key, 3)

    x = jax.random.normal(kx, (B, in_chans, H, W), dtype=jnp.float32)
    weight = jax.random.normal(
        kw, (embed_dim, in_chans, patch_size, patch_size),
        dtype=jnp.float32) * 0.02
    bias = jax.random.normal(kb, (embed_dim,), dtype=jnp.float32) * 0.02

    fwd = jax.jit(functools.partial(patch_embed_2d, patch_size=patch_size))
    out = fwd(x, weight, bias)
    out = jax.block_until_ready(out)

    assert out.shape == (B, embed_dim, H // patch_size, W // patch_size), out.shape

    # Reference 1: same bf16-operand / f32-accumulate semantics as the kernel.
    x_b = x.astype(jnp.bfloat16).astype(jnp.float32)
    w_b = weight.astype(jnp.bfloat16).astype(jnp.float32)
    ref_b = lax.conv_general_dilated(
        x_b, w_b,
        window_strides=(patch_size, patch_size),
        padding="VALID",
        dimension_numbers=("NCHW", "OIHW", "NCHW"),
    ) + bias.reshape(1, embed_dim, 1, 1)
    assert jnp.allclose(out, ref_b, atol=1e-3, rtol=1e-3), "mismatch vs bf16 conv ref"

    # Reference 2: full-f32 conv (loose tolerance for bf16 operand rounding).
    ref_f = lax.conv_general_dilated(
        x, weight,
        window_strides=(patch_size, patch_size),
        padding="VALID",
        dimension_numbers=("NCHW", "OIHW", "NCHW"),
    ) + bias.reshape(1, embed_dim, 1, 1)
    assert jnp.allclose(out, ref_f, atol=5e-2, rtol=5e-2), "mismatch vs f32 conv ref"

    print("KERNEL_OK")
</pallas_src>

<mosaic_0001>
module attributes {stable_mosaic.version = 11 : i64} {
  func.func @_patch_proj_kernel(%arg0: i32, %arg1: memref<256x96xbf16, #tpu.memory_space<vmem>>, %arg2: memref<96x128xbf16, #tpu.memory_space<vmem>>, %arg3: memref<1x128xf32, #tpu.memory_space<vmem>>, %arg4: memref<256x128xf32, #tpu.memory_space<vmem>>) attributes {dimension_semantics = [#tpu.dimension_semantics<parallel>], iteration_bounds = array<i64: 1>, scalar_prefetch = 0 : i64, scratch_operands = 0 : i64, tpu.core_type = #tpu.core_type<tc>, window_params = [{transform_indices = @transform_0, window_bounds = array<i64: 256, 96>}, {pipeline_mode = #tpu.pipeline_mode<synchronous>, transform_indices = @transform_1, window_bounds = array<i64: 96, 128>}, {pipeline_mode = #tpu.pipeline_mode<synchronous>, transform_indices = @transform_2, window_bounds = array<i64: 1, 128>}, {transform_indices = @transform_3, window_bounds = array<i64: 256, 128>}]} {
    %c0 = arith.constant 0 : index
    %c0_0 = arith.constant 0 : index
    %0 = vector.load %arg1[%c0, %c0_0] : memref<256x96xbf16, #tpu.memory_space<vmem>>, vector<256x96xbf16>
    %c0_1 = arith.constant 0 : index
    %c0_2 = arith.constant 0 : index
    %1 = vector.load %arg2[%c0_1, %c0_2] : memref<96x128xbf16, #tpu.memory_space<vmem>>, vector<96x128xbf16>
    %cst = arith.constant dense<0.000000e+00> : vector<256x128xf32>
    %2 = tpu.matmul %0, %1, %cst {dimension_numbers = #tpu.dot_dimension_numbers<[1], [0], [0], [1], [0, 0, 1, 1], [], []>} : vector<256x96xbf16>, vector<96x128xbf16>, vector<256x128xf32> -> vector<256x128xf32>
    %c0_3 = arith.constant 0 : index
    %c0_4 = arith.constant 0 : index
    %3 = vector.load %arg3[%c0_3, %c0_4] : memref<1x128xf32, #tpu.memory_space<vmem>>, vector<1x128xf32>
    %4 = vector.broadcast %3 : vector<1x128xf32> to vector<256x128xf32>
    %5 = arith.addf %2, %4 : vector<256x128xf32>
    %c0_5 = arith.constant 0 : index
    %c0_6 = arith.constant 0 : index
    %6 = vector.load %arg4[%c0_5, %c0_6] : memref<256x128xf32, #tpu.memory_space<vmem>>, vector<256x128xf32>
    tpu.vector_store %arg4[%c0_5, %c0_6], %5 {strides = array<i32>} : memref<256x128xf32, #tpu.memory_space<vmem>>, vector<256x128xf32>,
    return
  }
  func.func @transform_0(%arg0: i32) -> (i32, i32) {
    %c0_i32 = arith.constant 0 : i32
    %c0_i32_0 = arith.constant 0 : i32
    return %arg0, %c0_i32 : i32, i32
  }
  func.func @transform_1(%arg0: i32) -> (i32, i32) {
    %c0_i32 = arith.constant 0 : i32
    %c0_i32_0 = arith.constant 0 : i32
    %c0_i32_1 = arith.constant 0 : i32
    return %c0_i32, %c0_i32_0 : i32, i32
  }
  func.func @transform_2(%arg0: i32) -> (i32, i32) {
    %c0_i32 = arith.constant 0 : i32
    %c0_i32_0 = arith.constant 0 : i32
    %c0_i32_1 = arith.constant 0 : i32
    return %c0_i32, %c0_i32_0 : i32, i32
  }
  func.func @transform_3(%arg0: i32) -> (i32, i32) {
    %c0_i32 = arith.constant 0 : i32
    %c0_i32_0 = arith.constant 0 : i32
    return %arg0, %c0_i32 : i32, i32
  }
}

</mosaic_0001>

<llo_original>
// kernel: patch_embed_2d.1
$region0: #{patch_embed_2d.1}
  #allocation0 [shape = 'u32[]', space=smem, size = 0x4, offset = 0x4, fixed_abs, tag = 'smem constant byte address 0x4 - core index']
  #allocation1 [shape = 'u32[72,128]{1,0:T(1,128)}', space=vmem, size = 0x9000, scoped, tag = 'internal scratch']
  %s0 = inlined_call_operand.vmem [shape: bf16[256,96], index: 0, kind: input, shape index: {}]
  %s1 = inlined_call_operand.vmem [shape: bf16[96,128], index: 1, kind: input, shape index: {}]
  %s2 = inlined_call_operand.vmem [shape: f32[1,128], index: 2, kind: input, shape index: {}]
  %s3 = inlined_call_operand.vmem [shape: f32[256,128], index: 3, kind: output, shape index: {}]
  %s4 = sld [smem:[#allocation0]]
  $region22: #{patch_embed_2d.1} parent=0
    _
  %s6 = ssub.s32 1, %s4
  %s7 = scalar_select 0, %s6, %s4
  // Predicated region
  $region2: #{patch_embed_2d.1} parent=0 // pred_check
    _
  $region3: #{patch_embed_2d.1} parent=0 // pred_check_branch
    %9 = sbr.rel (0) target = $region5
  $region4: #{patch_embed_2d.1} parent=0 // pred_region
    _
  $region5: #{patch_embed_2d.1} parent=0 // pred_fallthru
    _
  // Predicated region
  $region6: #{patch_embed_2d.1} parent=0 // pred_check
    _
  $region7: #{patch_embed_2d.1} parent=0 // pred_check_branch
    %11 = sbr.rel (0) target = $region9
  $region8: #{patch_embed_2d.1} parent=0 // pred_region
    _
  $region9: #{patch_embed_2d.1} parent=0 // pred_fallthru
    _
  // Predicated region
  $region10: #{patch_embed_2d.1} parent=0 // pred_check
    _
  $region11: #{patch_embed_2d.1} parent=0 // pred_check_branch
    %13 = sbr.rel (0) target = $region13
  $region12: #{patch_embed_2d.1} parent=0 // pred_region
    _
  $region13: #{patch_embed_2d.1} parent=0 // pred_fallthru
    _
  %v15 = vld [vmem:[%s0] sm:$0xf]
  %v16 = vld [vmem:[%s0 + $0x4] sm:$0xf]
  %v17 = vld [vmem:[%s0 + $0x8] sm:$0xf]
  %v18 = vld [vmem:[%s0 + $0xc] sm:$0xf]
  %v19 = vld [vmem:[%s0 + $0x10] sm:$0xf]
  %v20 = vld [vmem:[%s0 + $0x14] sm:$0xf]
  %v21 = vld [vmem:[%s0 + $0x18] sm:$0xf]
  %v22 = vld [vmem:[%s0 + $0x1c] sm:$0xf]
  %v23 = vld [vmem:[%s0 + $0x20] sm:$0xf]
  %v24 = vld [vmem:[%s0 + $0x24] sm:$0xf]
  %v25 = vld [vmem:[%s0 + $0x28] sm:$0xf]
  %v26 = vld [vmem:[%s0 + $0x2c] sm:$0xf]
  %v27 = vld [vmem:[%s0 + $0x30] sm:$0xf]
  %v28 = vld [vmem:[%s0 + $0x34] sm:$0xf]
  %v29 = vld [vmem:[%s0 + $0x38] sm:$0xf]
  %v30 = vld [vmem:[%s0 + $0x3c] sm:$0xf]
  %v31 = vld [vmem:[%s0 + $0x40] sm:$0xf]
  %v32 = vld [vmem:[%s0 + $0x44] sm:$0xf]
  %v33 = vld [vmem:[%s0 + $0x48] sm:$0xf]
  %v34 = vld [vmem:[%s0 + $0x4c] sm:$0xf]
  %v35 = vld [vmem:[%s0 + $0x50] sm:$0xf]
  %v36 = vld [vmem:[%s0 + $0x54] sm:$0xf]
  %v37 = vld [vmem:[%s0 + $0x58] sm:$0xf]
  %v38 = vld [vmem:[%s0 + $0x5c] sm:$0xf]
  %v39 = vld [vmem:[%s0 + $0x60] sm:$0xf]
  %v40 = vld [vmem:[%s0 + $0x64] sm:$0xf]
  %v41 = vld [vmem:[%s0 + $0x68] sm:$0xf]
  %v42 = vld [vmem:[%s0 + $0x6c] sm:$0xf]
  %v43 = vld [vmem:[%s0 + $0x70] sm:$0xf]
  %v44 = vld [vmem:[%s0 + $0x74] sm:$0xf]
  %v45 = vld [vmem:[%s0 + $0x78] sm:$0xf]
  %v46 = vld [vmem:[%s0 + $0x7c] sm:$0xf]
  %v47 = vld [vmem:[%s1] sm:$0xf]
  %v48 = vld [vmem:[%s1 + $0x4] sm:$0xf]
  %v49 = vld [vmem:[%s1 + $0x8] sm:$0xf]
  %v50 = vld [vmem:[%s1 + $0xc] sm:$0xf]
  %v51 = vld [vmem:[%s1 + $0x10] sm:$0xf]
  %v52 = vld [vmem:[%s1 + $0x14] sm:$0xf]
  %v53 = vld [vmem:[%s1 + $0x18] sm:$0xf]
  %v54 = vld [vmem:[%s1 + $0x1c] sm:$0xf]
  %v55 = vld [vmem:[%s1 + $0x20] sm:$0xf]
  %v56 = vld [vmem:[%s1 + $0x24] sm:$0xf]
  %v57 = vld [vmem:[%s1 + $0x28] sm:$0xf]
  %v58 = vld [vmem:[%s1 + $0x2c] sm:$0xf]
  %v59 = vld [vmem:[%s2] sm:$0x1]
  %v61 = vperm.slane %v59, 0
  %v95 = vunpack.c.l.b16 %v15
  %v96 = vunpack.c.l.b16 %v16
  %v97 = vunpack.c.l.b16 %v17
  %v98 = vunpack.c.l.b16 %v18
  %v99 = vunpack.c.l.b16 %v19
  %v100 = vunpack.c.l.b16 %v20
  %v101 = vunpack.c.l.b16 %v21
  %v102 = vunpack.c.l.b16 %v22
  %v103 = vunpack.c.l.b16 %v23
  %v104 = vunpack.c.l.b16 %v24
  %v105 = vunpack.c.l.b16 %v25
  %v106 = vunpack.c.l.b16 %v26
  %v107 = vunpack.c.l.b16 %v27
  %v108 = vunpack.c.l.b16 %v28
  %v109 = vunpack.c.l.b16 %v29
  %v110 = vunpack.c.l.b16 %v30
  %v111 = vunpack.c.l.b16 %v31
  %v112 = vunpack.c.l.b16 %v32
  %v113 = vunpack.c.l.b16 %v33
  %v114 = vunpack.c.l.b16 %v34
  %v115 = vunpack.c.l.b16 %v35
  %v116 = vunpack.c.l.b16 %v36
  %v117 = vunpack.c.l.b16 %v37
  %v118 = vunpack.c.l.b16 %v38
  %v119 = vunpack.c.l.b16 %v39
  %v120 = vunpack.c.l.b16 %v40
  %v121 = vunpack.c.l.b16 %v41
  %v122 = vunpack.c.l.b16 %v42
  %v123 = vunpack.c.l.b16 %v43
  %v124 = vunpack.c.l.b16 %v44
  %v125 = vunpack.c.l.b16 %v45
  %v126 = vunpack.c.l.b16 %v46
  %v127 = vpack.c.b16 %v96, %v95
  %v128 = vpack.c.b16 %v98, %v97
  %v129 = vpack.c.b16 %v100, %v99
  %v130 = vpack.c.b16 %v102, %v101
  %v131 = vpack.c.b16 %v104, %v103
  %v132 = vpack.c.b16 %v106, %v105
  %v133 = vpack.c.b16 %v108, %v107
  %v134 = vpack.c.b16 %v110, %v109
  %v135 = vpack.c.b16 %v112, %v111
  %v136 = vpack.c.b16 %v114, %v113
  %v137 = vpack.c.b16 %v116, %v115
  %v138 = vpack.c.b16 %v118, %v117
  %v139 = vpack.c.b16 %v120, %v119
  %v140 = vpack.c.b16 %v122, %v121
  %v141 = vpack.c.b16 %v124, %v123
  %v142 = vpack.c.b16 %v126, %v125
  %v155 = vunpack.c.l.b16 %v47
  %v156 = vunpack.c.l.b16 %v48
  %v157 = vunpack.c.l.b16 %v49
  %v158 = vunpack.c.l.b16 %v50
  %v159 = vunpack.c.l.b16 %v51
  %v160 = vunpack.c.l.b16 %v52
  %v161 = vunpack.c.l.b16 %v53
  %v162 = vunpack.c.l.b16 %v54
  %v163 = vunpack.c.l.b16 %v55
  %v164 = vunpack.c.l.b16 %v56
  %v165 = vunpack.c.l.b16 %v57
  %v166 = vunpack.c.l.b16 %v58
  %v167 = vpack.c.b16 %v156, %v155
  %v168 = vpack.c.b16 %v158, %v157
  %v169 = vpack.c.b16 %v160, %v159
  %v170 = vpack.c.b16 %v162, %v161
  %v171 = vpack.c.b16 %v164, %v163
  %v172 = vpack.c.b16 %v166, %v165
  %vm179 = vcmask 785408
  %v181 = vsel %vm179, %v127, 0
  %v184 = vsel %vm179, %v128, 0
  %v187 = vsel %vm179, %v129, 0
  %v190 = vsel %vm179, %v130, 0
  %v193 = vsel %vm179, %v131, 0
  %v196 = vsel %vm179, %v132, 0
  %v199 = vsel %vm179, %v133, 0
  %v202 = vsel %vm179, %v134, 0
  %v205 = vsel %vm179, %v135, 0
  %v208 = vsel %vm179, %v136, 0
  %v211 = vsel %vm179, %v137, 0
  %v214 = vsel %vm179, %v138, 0
  %v217 = vsel %vm179, %v139, 0
  %v220 = vsel %vm179, %v140, 0
  %v223 = vsel %vm179, %v141, 0
  %v226 = vsel %vm179, %v142, 0
  %228 = vmatpush.bf16.msra.mxu0 0
  %229 = vmatpush.bf16.msra.mxu0 0
  %230 = vmatpush.bf16.msra.mxu0 %v172
  %231 = vmatpush.bf16.msra.mxu0 %v171
  %232 = vmatpush.bf16.msra.mxu0 %v170
  %233 = vmatpush.bf16.msra.mxu0 %v169
  %234 = vmatpush.bf16.msra.mxu0 %v168
  %235 = vmatpush.bf16.msra.mxu0 %v167
  %236 = vmatmul.bf16.gmra.mxu0 %v181
  %v237 = vpop.f32.mrf.mxu0
  %v238 = vadd.f32 %v61, %v237
  %v239 = vpop.f32.mrf.mxu0
  %v240 = vadd.f32 %v61, %v239
  %241 = vmatmul.bf16.gmra.mxu0 %v184
  %v242 = vpop.f32.mrf.mxu0
  %v243 = vadd.f32 %v61, %v242
  %v244 = vpop.f32.mrf.mxu0
  %v245 = vadd.f32 %v61, %v244
  %246 = vmatmul.bf16.gmra.mxu0 %v187
  %v247 = vpop.f32.mrf.mxu0
  %v248 = vadd.f32 %v61, %v247
  %v249 = vpop.f32.mrf.mxu0
  %v250 = vadd.f32 %v61, %v249
  %251 = vmatmul.bf16.gmra.mxu0 %v190
  %v252 = vpop.f32.mrf.mxu0
  %v253 = vadd.f32 %v61, %v252
  %v254 = vpop.f32.mrf.mxu0
  %v255 = vadd.f32 %v61, %v254
  %256 = vmatmul.bf16.gmra.mxu0 %v193
  %v257 = vpop.f32.mrf.mxu0
  %v258 = vadd.f32 %v61, %v257
  %v259 = vpop.f32.mrf.mxu0
  %v260 = vadd.f32 %v61, %v259
  %261 = vmatmul.bf16.gmra.mxu0 %v196
  %v262 = vpop.f32.mrf.mxu0
  %v263 = vadd.f32 %v61, %v262
  %v264 = vpop.f32.mrf.mxu0
  %v265 = vadd.f32 %v61, %v264
  %266 = vmatmul.bf16.gmra.mxu0 %v199
  %v267 = vpop.f32.mrf.mxu0
  %v268 = vadd.f32 %v61, %v267
  %v269 = vpop.f32.mrf.mxu0
  %v270 = vadd.f32 %v61, %v269
  %271 = vmatmul.bf16.gmra.mxu0 %v202
  %v272 = vpop.f32.mrf.mxu0
  %v273 = vadd.f32 %v61, %v272
  %v274 = vpop.f32.mrf.mxu0
  %v275 = vadd.f32 %v61, %v274
  %276 = vmatmul.bf16.gmra.mxu0 %v205
  %v277 = vpop.f32.mrf.mxu0
  %v278 = vadd.f32 %v61, %v277
  %v279 = vpop.f32.mrf.mxu0
  %v280 = vadd.f32 %v61, %v279
  %281 = vmatmul.bf16.gmra.mxu0 %v208
  %v282 = vpop.f32.mrf.mxu0
  %v283 = vadd.f32 %v61, %v282
  %v284 = vpop.f32.mrf.mxu0
  %v285 = vadd.f32 %v61, %v284
  %286 = vmatmul.bf16.gmra.mxu0 %v211
  %v287 = vpop.f32.mrf.mxu0
  %v288 = vadd.f32 %v61, %v287
  %v289 = vpop.f32.mrf.mxu0
  %v290 = vadd.f32 %v61, %v289
  %291 = vmatmul.bf16.gmra.mxu0 %v214
  %v292 = vpop.f32.mrf.mxu0
  %v293 = vadd.f32 %v61, %v292
  %v294 = vpop.f32.mrf.mxu0
  %v295 = vadd.f32 %v61, %v294
  %296 = vmatmul.bf16.gmra.mxu0 %v217
  %v297 = vpop.f32.mrf.mxu0
  %v298 = vadd.f32 %v61, %v297
  %v299 = vpop.f32.mrf.mxu0
  %v300 = vadd.f32 %v61, %v299
  %301 = vmatmul.bf16.gmra.mxu0 %v220
  %v302 = vpop.f32.mrf.mxu0
  %v303 = vadd.f32 %v61, %v302
  %v304 = vpop.f32.mrf.mxu0
  %v305 = vadd.f32 %v61, %v304
  %306 = vmatmul.bf16.gmra.mxu0 %v223
  %v307 = vpop.f32.mrf.mxu0
  %v308 = vadd.f32 %v61, %v307
  %v309 = vpop.f32.mrf.mxu0
  %v310 = vadd.f32 %v61, %v309
  %311 = vmatmul.bf16.gmra.mxu0 %v226
  %v312 = vpop.f32.mrf.mxu0
  %v313 = vadd.f32 %v61, %v312
  %v314 = vpop.f32.mrf.mxu0
  %v315 = vadd.f32 %v61, %v314
  %316 = vdwg.mxu0
  %317 = vst [vmem:[%s3] sm:$0xff] %v238
  %318 = vst [vmem:[%s3 + $0x8] sm:$0xff] %v240
  %319 = vst [vmem:[%s3 + $0x10] sm:$0xff] %v243
  %320 = vst [vmem:[%s3 + $0x18] sm:$0xff] %v245
  %321 = vst [vmem:[%s3 + $0x20] sm:$0xff] %v248
  %322 = vst [vmem:[%s3 + $0x28] sm:$0xff] %v250
  %323 = vst [vmem:[%s3 + $0x30] sm:$0xff] %v253
  %324 = vst [vmem:[%s3 + $0x38] sm:$0xff] %v255
  %325 = vst [vmem:[%s3 + $0x40] sm:$0xff] %v258
  %326 = vst [vmem:[%s3 + $0x48] sm:$0xff] %v260
  %327 = vst [vmem:[%s3 + $0x50] sm:$0xff] %v263
  %328 = vst [vmem:[%s3 + $0x58] sm:$0xff] %v265
  %329 = vst [vmem:[%s3 + $0x60] sm:$0xff] %v268
  %330 = vst [vmem:[%s3 + $0x68] sm:$0xff] %v270
  %331 = vst [vmem:[%s3 + $0x70] sm:$0xff] %v273
  %332 = vst [vmem:[%s3 + $0x78] sm:$0xff] %v275
  %333 = vst [vmem:[%s3 + $0x80] sm:$0xff] %v278
  %334 = vst [vmem:[%s3 + $0x88] sm:$0xff] %v280
  %335 = vst [vmem:[%s3 + $0x90] sm:$0xff] %v283
  %336 = vst [vmem:[%s3 + $0x98] sm:$0xff] %v285
  %337 = vst [vmem:[%s3 + $0xa0] sm:$0xff] %v288
  %338 = vst [vmem:[%s3 + $0xa8] sm:$0xff] %v290
  %339 = vst [vmem:[%s3 + $0xb0] sm:$0xff] %v293
  %340 = vst [vmem:[%s3 + $0xb8] sm:$0xff] %v295
  %341 = vst [vmem:[%s3 + $0xc0] sm:$0xff] %v298
  %342 = vst [vmem:[%s3 + $0xc8] sm:$0xff] %v300
  %343 = vst [vmem:[%s3 + $0xd0] sm:$0xff] %v303
  %344 = vst [vmem:[%s3 + $0xd8] sm:$0xff] %v305
  %345 = vst [vmem:[%s3 + $0xe0] sm:$0xff] %v308
  %346 = vst [vmem:[%s3 + $0xe8] sm:$0xff] %v310
  %347 = vst [vmem:[%s3 + $0xf0] sm:$0xff] %v313
  %348 = vst [vmem:[%s3 + $0xf8] sm:$0xff] %v315
  // Predicated region
  $region14: #{patch_embed_2d.1} parent=0 // pred_check
    _
  $region15: #{patch_embed_2d.1} parent=0 // pred_check_branch
    %350 = sbr.rel (0) target = $region17
  $region16: #{patch_embed_2d.1} parent=0 // pred_region
    _
  $region17: #{patch_embed_2d.1} parent=0 // pred_fallthru
    _
  // Predicated region
  $region18: #{patch_embed_2d.1} parent=0 // pred_check
    _
  $region19: #{patch_embed_2d.1} parent=0 // pred_check_branch
    %352 = sbr.rel (0) target = $region21
  $region20: #{patch_embed_2d.1} parent=0 // pred_region
    _
  $region21: #{patch_embed_2d.1} parent=0 // pred_fallthru
    _

</llo_original>
